<compile_context>
chip_gen: v7x
topology: tpu7x:2x2x1
jax: 0.10.0
libtpu: 0.0.40
codegen_flags: <defaults>
</compile_context>

<pallas_src>
import functools

import jax
import jax.numpy as jnp
from jax import lax
from jax.experimental import pallas as pl
from jax.experimental.pallas import tpu as pltpu


# ----------------------------------------------------------------------------
# Small helpers
# ----------------------------------------------------------------------------
def _round_up(v, m):
    return (v + m - 1) // m * m


def _cdiv(a, b):
    return (a + b - 1) // b


def _pad_axis(a, axis, new_size):
    if a.shape[axis] == new_size:
        return a
    widths = [(0, 0)] * a.ndim
    widths[axis] = (0, new_size - a.shape[axis])
    return jnp.pad(a, widths)


def _vmem_capacity_bytes():
    try:
        return int(pltpu.get_tpu_info().vmem_capacity_bytes)
    except Exception:
        return 64 * 1024 * 1024  # conservative fallback (v7x per-core VMEM)


def _default_vmem_limit():
    return int(_vmem_capacity_bytes() * 0.8)


def _pick_k_tile(nf, fits):
    """Largest K tile (mult of 128, preferring >=256) within the VMEM budget."""
    if fits(nf):
        return nf, nf
    tk = None
    for cand in (4096, 2048, 1024, 512, 256, 128):
        if cand < nf and nf % cand == 0 and fits(cand):
            tk = cand
            break
    if tk is None:
        # Fallback: no divisor fits -> zero-pad the K axis (rare; costs one HBM
        # copy of x, only when nf has an awkward factorization).
        for cand in (4096, 2048, 1024, 512, 256, 128):
            if cand < nf and fits(cand):
                tk = cand
                break
        if tk is None:
            tk = 128
    return tk, _round_up(nf, tk)


# ----------------------------------------------------------------------------
# Kernels: shared Linear (individual=False)
# ----------------------------------------------------------------------------
def _shared_kernel_1k(x_ref, w_ref, b_ref, o_ref, *, compute_dtype):
    # Single K step: no accumulator scratch, direct store.
    x = x_ref[...].astype(compute_dtype)
    w = w_ref[...].astype(compute_dtype)
    acc = jnp.dot(x, w, preferred_element_type=jnp.float32)
    o_ref[...] = (acc + b_ref[...]).astype(o_ref.dtype)


def _shared_kernel_ktiled(x_ref, w_ref, b_ref, o_ref, acc_ref, *, compute_dtype):
    k = pl.program_id(1)

    @pl.when(k == 0)
    def _():
        # Bias-initialized accumulator: drops the finalize "+ b" pass.
        acc_ref[...] = jnp.broadcast_to(b_ref[...], acc_ref.shape)

    acc_ref[...] += jnp.dot(x_ref[...].astype(compute_dtype),
                            w_ref[...].astype(compute_dtype),
                            preferred_element_type=jnp.float32)

    @pl.when(k == pl.num_programs(1) - 1)
    def _():
        o_ref[...] = acc_ref[...].astype(o_ref.dtype)


# ----------------------------------------------------------------------------
# Kernels: per-variable Linear (individual=True)
# ----------------------------------------------------------------------------
_IND_DNUMS = (((2,), (1,)), ((1,), (0,)))  # batch = vars; contract nf


def _individual_kernel_1k(x_ref, w_ref, b_ref, o_ref, *, compute_dtype):
    # x_ref: [bs, vb, nf], w_ref: [vb, nf, tw_p], b_ref: [vb, tw_p]
    # o_ref: [vb, bs, tw_p]   (vars-major layout -> lane-dense stores)
    x = x_ref[...].astype(compute_dtype)
    w = w_ref[...].astype(compute_dtype)
    acc = lax.dot_general(x, w, _IND_DNUMS, preferred_element_type=jnp.float32)
    o_ref[...] = (acc + b_ref[...][:, None, :]).astype(o_ref.dtype)


def _individual_kernel_ktiled(x_ref, w_ref, b_ref, o_ref, acc_ref, *,
                              compute_dtype):
    k = pl.program_id(1)

    @pl.when(k == 0)
    def _():
        acc_ref[...] = jnp.broadcast_to(b_ref[...][:, None, :], acc_ref.shape)

    x = x_ref[...].astype(compute_dtype)
    w = w_ref[...].astype(compute_dtype)
    acc_ref[...] += lax.dot_general(x, w, _IND_DNUMS,
                                    preferred_element_type=jnp.float32)

    @pl.when(k == pl.num_programs(1) - 1)
    def _():
        o_ref[...] = acc_ref[...].astype(o_ref.dtype)


# ----------------------------------------------------------------------------
# Wrappers
# ----------------------------------------------------------------------------
def flatten_head_shared(x, w, b, *, tm=1024, compute_dtype=None,
                        vmem_budget_bytes=None, vmem_limit_bytes=None):
    """individual=False.

    x: [bs, n_vars, d_model, patch_num]
    w: [nf, target_window]   (transposed vs. torch Linear.weight)
    b: [target_window]
    returns: [bs, n_vars, target_window]
    """
    bs, n_vars, d_model, patch_num = x.shape
    nf, tw = w.shape
    assert nf == d_model * patch_num

    cdt = jnp.dtype(compute_dtype) if compute_dtype is not None else x.dtype
    if vmem_budget_bytes is None:
        vmem_budget_bytes = int(_vmem_capacity_bytes() * 0.7)
    if vmem_limit_bytes is None:
        vmem_limit_bytes = _default_vmem_limit()

    M = bs * n_vars
    x_flat = x.reshape(M, nf)              # free reshape, no copy
    tw_p = _round_up(tw, 128)              # lane-dense output columns

    # --- M tiling: no host-side padding of x; ragged last block is masked.
    M8 = _round_up(M, 8)
    tm_eff = min(_round_up(tm, 8), M8)
    n_m = _cdiv(M, tm_eff)
    if n_m == 1 and M8 >= 16:
        # Guarantee >=2 steps on the parallel axis (both v7x TensorCores busy).
        tm_eff = _round_up(_cdiv(M8, 2), 8)
        n_m = _cdiv(M, tm_eff)

    # --- K tiling decided from the actual VMEM footprint (per-gen budget).
    def fits(tk):
        x_bytes = 2 * tm_eff * tk * x.dtype.itemsize
        w_bytes = 2 * tk * tw_p * cdt.itemsize
        o_bytes = 2 * tm_eff * tw_p * x.dtype.itemsize
        b_bytes = 2 * tw_p * 4
        acc_bytes = tm_eff * tw_p * 4 if tk < nf else 0
        return x_bytes + w_bytes + o_bytes + b_bytes + acc_bytes <= vmem_budget_bytes

    tk_eff, nf_p = _pick_k_tile(nf, fits)
    n_k = nf_p // tk_eff

    # Host-side padding only where cheap / unavoidable: weight & bias columns,
    # plus the K axis of x in the rare non-dividing-K fallback.
    x_in = _pad_axis(x_flat, 1, nf_p)
    w_in = _pad_axis(_pad_axis(w, 0, nf_p), 1, tw_p).astype(cdt)
    b_in = _pad_axis(b.reshape(1, tw), 1, tw_p).astype(jnp.float32)

    if n_k == 1:
        grid = (n_m,)
        in_specs = [
            pl.BlockSpec((tm_eff, nf_p), lambda i: (i, 0)),
            pl.BlockSpec((nf_p, tw_p), lambda i: (0, 0)),   # resident weight
            pl.BlockSpec((1, tw_p), lambda i: (0, 0)),
        ]
        out_spec = pl.BlockSpec((tm_eff, tw_p), lambda i: (i, 0))
        scratch = []
        kernel = functools.partial(_shared_kernel_1k, compute_dtype=cdt)
        dims = ("parallel",)
    else:
        grid = (n_m, n_k)
        in_specs = [
            pl.BlockSpec((tm_eff, tk_eff), lambda i, k: (i, k)),
            pl.BlockSpec((tk_eff, tw_p), lambda i, k: (k, 0)),
            pl.BlockSpec((1, tw_p), lambda i, k: (0, 0)),
        ]
        out_spec = pl.BlockSpec((tm_eff, tw_p), lambda i, k: (i, 0))
        scratch = [pltpu.VMEM((tm_eff, tw_p), jnp.float32)]
        kernel = functools.partial(_shared_kernel_ktiled, compute_dtype=cdt)
        dims = ("parallel", "arbitrary")

    out = pl.pallas_call(
        kernel,
        out_shape=jax.ShapeDtypeStruct((M, tw_p), x.dtype),
        grid_spec=pltpu.PrefetchScalarGridSpec(
            num_scalar_prefetch=0,
            grid=grid,
            in_specs=in_specs,
            out_specs=out_spec,
            scratch_shapes=scratch,
        ),
        compiler_params=pltpu.CompilerParams(
            dimension_semantics=dims,
            vmem_limit_bytes=vmem_limit_bytes,
        ),
    )(x_in, w_in, b_in)

    return out[:, :tw].reshape(bs, n_vars, tw)


def flatten_head_individual(x, w, b, *, compute_dtype=None,
                            vmem_budget_bytes=None, vmem_limit_bytes=None):
    """individual=True (one Linear per variable).

    x: [bs, n_vars, d_model, patch_num]
    w: [n_vars, nf, target_window]
    b: [n_vars, target_window]
    returns: [bs, n_vars, target_window]
    """
    bs, n_vars, d_model, patch_num = x.shape
    nv_w, nf, tw = w.shape
    assert nv_w == n_vars and nf == d_model * patch_num

    cdt = jnp.dtype(compute_dtype) if compute_dtype is not None else x.dtype
    if vmem_budget_bytes is None:
        vmem_budget_bytes = int(_vmem_capacity_bytes() * 0.7)
    if vmem_limit_bytes is None:
        vmem_limit_bytes = _default_vmem_limit()

    x_flat = x.reshape(bs, n_vars, nf)      # free; NO host transposes
    tw_p = _round_up(tw, 128)

    # vars block: sublane axis of the x block -> multiple of 8 or all vars.
    vb = n_vars if n_vars <= 8 else 8
    n_v = _cdiv(n_vars, vb)                 # ragged last block, no padding of x

    def fits(tk):
        x_bytes = 2 * bs * vb * tk * x.dtype.itemsize
        w_bytes = 2 * vb * tk * tw_p * cdt.itemsize
        o_bytes = 2 * vb * bs * tw_p * x.dtype.itemsize
        b_bytes = 2 * vb * tw_p * 4
        acc_bytes = vb * bs * tw_p * 4 if tk < nf else 0
        return x_bytes + w_bytes + o_bytes + b_bytes + acc_bytes <= vmem_budget_bytes

    tk_eff, nf_p = _pick_k_tile(nf, fits)
    n_k = nf_p // tk_eff

    x_in = _pad_axis(x_flat, 2, nf_p)
    w_in = _pad_axis(_pad_axis(w, 1, nf_p), 2, tw_p).astype(cdt)
    b_in = _pad_axis(b, 1, tw_p).astype(jnp.float32)

    if n_k == 1:
        grid = (n_v,)
        in_specs = [
            pl.BlockSpec((bs, vb, nf_p), lambda v: (0, v, 0)),
            pl.BlockSpec((vb, nf_p, tw_p), lambda v: (v, 0, 0)),
            pl.BlockSpec((vb, tw_p), lambda v: (v, 0)),
        ]
        out_spec = pl.BlockSpec((vb, bs, tw_p), lambda v: (v, 0, 0))
        scratch = []
        kernel = functools.partial(_individual_kernel_1k, compute_dtype=cdt)
        dims = ("parallel",)
    else:
        grid = (n_v, n_k)
        in_specs = [
            pl.BlockSpec((bs, vb, tk_eff), lambda v, k: (0, v, k)),
            pl.BlockSpec((vb, tk_eff, tw_p), lambda v, k: (v, k, 0)),
            pl.BlockSpec((vb, tw_p), lambda v, k: (v, 0)),
        ]
        out_spec = pl.BlockSpec((vb, bs, tw_p), lambda v, k: (v, 0, 0))
        scratch = [pltpu.VMEM((vb, bs, tw_p), jnp.float32)]
        kernel = functools.partial(_individual_kernel_ktiled, compute_dtype=cdt)
        dims = ("parallel", "arbitrary")

    out = pl.pallas_call(
        kernel,
        out_shape=jax.ShapeDtypeStruct((n_vars, bs, tw_p), x.dtype),
        grid_spec=pltpu.PrefetchScalarGridSpec(
            num_scalar_prefetch=0,
            grid=grid,
            in_specs=in_specs,
            out_specs=out_spec,
            scratch_shapes=scratch,
        ),
        compiler_params=pltpu.CompilerParams(
            dimension_semantics=dims,
            vmem_limit_bytes=vmem_limit_bytes,
        ),
    )(x_in, w_in, b_in)

    # [n_vars, bs, tw_p] -> [bs, n_vars, tw]; tiny tensor, cheap swap.
    return jnp.swapaxes(out[:, :, :tw], 0, 1)


# ----------------------------------------------------------------------------
# Pure-JAX references
# ----------------------------------------------------------------------------
def _ref_shared(x, w, b):
    bs, nv, dm, pn = x.shape
    return x.reshape(bs, nv, dm * pn) @ w + b


def _ref_individual(x, w, b):
    bs, nv, dm, pn = x.shape
    xf = x.reshape(bs, nv, dm * pn)
    return jnp.einsum("bvf,vft->bvt", xf, w) + b[None, :, :]


# ----------------------------------------------------------------------------
# Self-test
# ----------------------------------------------------------------------------
def _make_case(key, bs, nv, dm, pn, tw, individual):
    nf = dm * pn
    kx, kw, kb = jax.random.split(key, 3)
    x = jax.random.normal(kx, (bs, nv, dm, pn), jnp.float32)
    bound = 1.0 / (nf ** 0.5)
    if individual:
        w = jax.random.uniform(kw, (nv, nf, tw), jnp.float32, -bound, bound)
        b = jax.random.uniform(kb, (nv, tw), jnp.float32, -bound, bound)
    else:
        w = jax.random.uniform(kw, (nf, tw), jnp.float32, -bound, bound)
        b = jax.random.uniform(kb, (tw,), jnp.float32, -bound, bound)
    return x, w, b


def _check(got, want, atol, rtol, name):
    assert got.shape == want.shape, (name, got.shape, want.shape)
    assert jnp.allclose(got, want, atol=atol, rtol=rtol), (
        name, float(jnp.max(jnp.abs(got - want))))


if __name__ == "__main__":
    key = jax.random.PRNGKey(0)
    keys = jax.random.split(key, 6)

    # A) shared, aligned shapes, single K step, resident weight
    x, w, b = _make_case(keys[0], 2, 4, 16, 8, 32, individual=False)
    y = jax.block_until_ready(flatten_head_shared(x, w, b))
    _check(y, _ref_shared(x, w, b), 1e-4, 1e-4, "shared_aligned")

    # B) shared, ragged M (=21), ragged nf (=96), ragged tw (=40), 2 M tiles
    x, w, b = _make_case(keys[1], 3, 7, 16, 6, 40, individual=False)
    y = jax.block_until_ready(flatten_head_shared(x, w, b))
    _check(y, _ref_shared(x, w, b), 1e-4, 1e-4, "shared_ragged")

    # C) shared, K-tiled path (tiny VMEM budget forces tk=128, 2 K steps)
    x, w, b = _make_case(keys[2], 2, 4, 16, 16, 32, individual=False)
    y = jax.block_until_ready(
        flatten_head_shared(x, w, b, vmem_budget_bytes=200_000))
    _check(y, _ref_shared(x, w, b), 1e-4, 1e-4, "shared_ktiled")

    # D) shared, bf16 compute path (MXU-native), f32 accumulation
    x, w, b = _make_case(keys[3], 2, 4, 16, 8, 32, individual=False)
    y = jax.block_until_ready(
        flatten_head_shared(x, w, b, compute_dtype=jnp.bfloat16))
    _check(y, _ref_shared(x, w, b), 3e-2, 3e-2, "shared_bf16")

    # E) individual, aligned shapes, single K step
    x, w, b = _make_case(keys[4], 2, 4, 16, 8, 32, individual=True)
    y = jax.block_until_ready(flatten_head_individual(x, w, b))
    _check(y, _ref_individual(x, w, b), 1e-4, 1e-4, "indiv_aligned")

    # F) individual, ragged n_vars (=9 -> vb=8, partial block), forced K tiling
    x, w, b = _make_case(keys[5], 2, 9, 16, 16, 40, individual=True)
    y = jax.block_until_ready(
        flatten_head_individual(x, w, b, vmem_budget_bytes=1_500_000))
    _check(y, _ref_individual(x, w, b), 1e-4, 1e-4, "indiv_ragged_ktiled")

    print("KERNEL_OK")
</pallas_src>

<mosaic_0001>
module attributes {stable_mosaic.version = 11 : i64} {
  func.func @_shared_kernel_1k(%arg0: i32, %arg1: memref<8x128xf32, #tpu.memory_space<vmem>>, %arg2: memref<128x128xf32, #tpu.memory_space<vmem>>, %arg3: memref<1x128xf32, #tpu.memory_space<vmem>>, %arg4: memref<8x128xf32, #tpu.memory_space<vmem>>) attributes {dimension_semantics = [#tpu.dimension_semantics<parallel>], iteration_bounds = array<i64: 1>, scalar_prefetch = 0 : i64, scratch_operands = 0 : i64, tpu.core_type = #tpu.core_type<tc>, window_params = [{transform_indices = @transform_0, window_bounds = array<i64: 8, 128>}, {pipeline_mode = #tpu.pipeline_mode<synchronous>, transform_indices = @transform_1, window_bounds = array<i64: 128, 128>}, {pipeline_mode = #tpu.pipeline_mode<synchronous>, transform_indices = @transform_2, window_bounds = array<i64: 1, 128>}, {transform_indices = @transform_3, window_bounds = array<i64: 8, 128>}]} {
    %c0 = arith.constant 0 : index
    %c0_0 = arith.constant 0 : index
    %0 = vector.load %arg1[%c0, %c0_0] : memref<8x128xf32, #tpu.memory_space<vmem>>, vector<8x128xf32>
    %c0_1 = arith.constant 0 : index
    %c0_2 = arith.constant 0 : index
    %1 = vector.load %arg2[%c0_1, %c0_2] : memref<128x128xf32, #tpu.memory_space<vmem>>, vector<128x128xf32>
    %cst = arith.constant dense<0.000000e+00> : vector<8x128xf32>
    %2 = tpu.matmul %0, %1, %cst {dimension_numbers = #tpu.dot_dimension_numbers<[1], [0], [0], [1], [0, 0, 1, 1], [], []>} : vector<8x128xf32>, vector<128x128xf32>, vector<8x128xf32> -> vector<8x128xf32>
    %c0_3 = arith.constant 0 : index
    %c0_4 = arith.constant 0 : index
    %3 = vector.load %arg3[%c0_3, %c0_4] : memref<1x128xf32, #tpu.memory_space<vmem>>, vector<1x128xf32>
    %4 = vector.broadcast %3 : vector<1x128xf32> to vector<8x128xf32>
    %5 = arith.addf %2, %4 : vector<8x128xf32>
    %c0_5 = arith.constant 0 : index
    %c0_6 = arith.constant 0 : index
    %6 = vector.load %arg4[%c0_5, %c0_6] : memref<8x128xf32, #tpu.memory_space<vmem>>, vector<8x128xf32>
    tpu.vector_store %arg4[%c0_5, %c0_6], %5 {strides = array<i32>} : memref<8x128xf32, #tpu.memory_space<vmem>>, vector<8x128xf32>,
    return
  }
  func.func @transform_0(%arg0: i32) -> (i32, i32) {
    %c0_i32 = arith.constant 0 : i32
    %c0_i32_0 = arith.constant 0 : i32
    return %arg0, %c0_i32 : i32, i32
  }
  func.func @transform_1(%arg0: i32) -> (i32, i32) {
    %c0_i32 = arith.constant 0 : i32
    %c0_i32_0 = arith.constant 0 : i32
    %c0_i32_1 = arith.constant 0 : i32
    return %c0_i32, %c0_i32_0 : i32, i32
  }
  func.func @transform_2(%arg0: i32) -> (i32, i32) {
    %c0_i32 = arith.constant 0 : i32
    %c0_i32_0 = arith.constant 0 : i32
    %c0_i32_1 = arith.constant 0 : i32
    return %c0_i32, %c0_i32_0 : i32, i32
  }
  func.func @transform_3(%arg0: i32) -> (i32, i32) {
    %c0_i32 = arith.constant 0 : i32
    %c0_i32_0 = arith.constant 0 : i32
    return %arg0, %c0_i32 : i32, i32
  }
}

</mosaic_0001>

<llo_original>
// kernel: tpu_custom_call.1
$region0: #{tpu_custom_call.1}
  #allocation0 [shape = 'u32[]', space=smem, size = 0x4, offset = 0x4, fixed_abs, tag = 'smem constant byte address 0x4 - core index']
  #allocation1 [shape = 'u32[144,128]{1,0:T(1,128)}', space=vmem, size = 0x12000, scoped, tag = 'internal scratch']
  %s0 = inlined_call_operand.hbm [shape: f32[8,128], index: 0, kind: input, shape index: {}]
  %s1 = inlined_call_operand.hbm [shape: f32[128,128], index: 1, kind: input, shape index: {}]
  %s2 = inlined_call_operand.vmem [shape: f32[1,128], index: 2, kind: input, shape index: {}]
  %s3 = inlined_call_operand.hbm [shape: f32[8,128], index: 3, kind: output, shape index: {}]
  %s4 = sld [smem:[#allocation0]]
  $region30: #{tpu_custom_call.1} parent=0
    _
  %s6 = ssub.s32 1, %s4
  %s7 = scalar_select 0, %s6, %s4
  $region1: #{tpu_custom_call.1} parent=0
    #allocation2 [shape = 'u8[4096]{0}', space=vmem, size = 0x1000, scoped, tag = 'input window, operand 0, single buffered']
    #allocation3 [shape = 's32[1]{0}', space=sflag, size = 0x4, scoped, tag = 'scoped memory for tpu_custom_call.1']
    #allocation4 [shape = 's32[1]{0}', space=sflag, size = 0x4, scoped, tag = 'scoped memory for tpu_custom_call.1']
    #allocation5 [shape = 'u8[65536]{0}', space=vmem, size = 0x10000, scoped, tag = 'input window, operand 1, single buffered']
    #allocation6 [shape = 's32[1]{0}', space=sflag, size = 0x4, scoped, tag = 'scoped memory for tpu_custom_call.1']
    #allocation7 [shape = 'u8[4096]{0}', space=vmem, size = 0x1000, scoped, tag = 'output window, operand 0, single buffered']
    %8 = vsyncpa [#allocation3], 0
    %9 = vsyncpa [#allocation6], 0
    %10 = vsyncpa [#allocation4], 0
    // Predicated region
    $region2: #{tpu_custom_call.1} parent=1 // pred_check
      _
    $region3: #{tpu_custom_call.1} parent=1 // pred_check_branch
      %12 = sbr.rel (0) target = $region5
    $region4: #{tpu_custom_call.1} parent=1 // pred_region
      %s14 = ssub.s32 128, 128
      %15 = vsyncadd [#allocation3], %s14
      %s17 = sshll.u32 [#allocation2], 4
      %s18 = int_to_ptr.vmem [resolvable:$true] %s17
      %20 = dma.hbm_to_vmem [thread:$0]  %s0, 128, %s18, [#allocation3]
    $region5: #{tpu_custom_call.1} parent=1 // pred_fallthru
      _
    // Predicated region
    $region6: #{tpu_custom_call.1} parent=1 // pred_check
      _
    $region7: #{tpu_custom_call.1} parent=1 // pred_check_branch
      %22 = sbr.rel (0) target = $region9
    $region8: #{tpu_custom_call.1} parent=1 // pred_region
      %s24 = ssub.s32 2048, 2048
      %25 = vsyncadd [#allocation6], %s24
      %s26 = sshll.u32 [#allocation5], 4
      %s27 = int_to_ptr.vmem [resolvable:$true] %s26
      %32 = dma.hbm_to_vmem [thread:$0]  %s1, 2048, %s27, [#allocation6], 128, 128, 8
    $region9: #{tpu_custom_call.1} parent=1 // pred_fallthru
      _
    // Predicated region
    $region10: #{tpu_custom_call.1} parent=1 // pred_check
      _
    $region11: #{tpu_custom_call.1} parent=1 // pred_check_branch
      %34 = sbr.rel (0) target = $region13
    $region12: #{tpu_custom_call.1} parent=1 // pred_region
      _
    $region13: #{tpu_custom_call.1} parent=1 // pred_fallthru
      _
    // Predicated region
    $region14: #{tpu_custom_call.1} parent=1 // pred_check
      _
    $region15: #{tpu_custom_call.1} parent=1 // pred_check_branch
      %36 = sbr.rel (0) target = $region17
    $region16: #{tpu_custom_call.1} parent=1 // pred_region
      %37 = dma.done [#allocation3], 128
    $region17: #{tpu_custom_call.1} parent=1 // pred_fallthru
      _
    // Predicated region
    $region18: #{tpu_custom_call.1} parent=1 // pred_check
      _
    $region19: #{tpu_custom_call.1} parent=1 // pred_check_branch
      %39 = sbr.rel (0) target = $region21
    $region20: #{tpu_custom_call.1} parent=1 // pred_region
      %40 = dma.done [#allocation6], 2048
    $region21: #{tpu_custom_call.1} parent=1 // pred_fallthru
      _
    %v41 = vld [vmem:[#allocation2] sm:$0xff]
    %v42 = vld [vmem:[#allocation5] sm:$0xff]
    %v43 = vld [vmem:[#allocation5 + $0x8] sm:$0xff]
    %v44 = vld [vmem:[#allocation5 + $0x10] sm:$0xff]
    %v45 = vld [vmem:[#allocation5 + $0x18] sm:$0xff]
    %v46 = vld [vmem:[#allocation5 + $0x20] sm:$0xff]
    %v47 = vld [vmem:[#allocation5 + $0x28] sm:$0xff]
    %v48 = vld [vmem:[#allocation5 + $0x30] sm:$0xff]
    %v49 = vld [vmem:[#allocation5 + $0x38] sm:$0xff]
    %v50 = vld [vmem:[#allocation5 + $0x40] sm:$0xff]
    %v51 = vld [vmem:[#allocation5 + $0x48] sm:$0xff]
    %v52 = vld [vmem:[#allocation5 + $0x50] sm:$0xff]
    %v53 = vld [vmem:[#allocation5 + $0x58] sm:$0xff]
    %v54 = vld [vmem:[#allocation5 + $0x60] sm:$0xff]
    %v55 = vld [vmem:[#allocation5 + $0x68] sm:$0xff]
    %v56 = vld [vmem:[#allocation5 + $0x70] sm:$0xff]
    %v57 = vld [vmem:[#allocation5 + $0x78] sm:$0xff]
    %v58 = vld [vmem:[%s2] sm:$0x1]
    %v60 = vlaneseq
    %v61 = vshrl.u32 %v60, 7
    %v62 = vsub.s32 0, %v61
    %v63 = vrot.slane %v58, %v62
    %65 = vmatprep.subr.mxu0 0.0
    %66 = vmatpush1.msra.mxu0 %v42
    %67 = vmatprep.subr.mxu0 0.0
    %68 = vmatpush1.msra.mxu0 %v43
    %69 = vmatprep.subr.mxu0 0.0
    %70 = vmatpush1.msra.mxu0 %v44
    %71 = vmatprep.subr.mxu0 0.0
    %72 = vmatpush1.msra.mxu0 %v45
    %73 = vmatprep.subr.mxu0 0.0
    %74 = vmatpush1.msra.mxu0 %v46
    %75 = vmatprep.subr.mxu0 0.0
    %76 = vmatpush1.msra.mxu0 %v47
    %77 = vmatprep.subr.mxu0 0.0
    %78 = vmatpush1.msra.mxu0 %v48
    %79 = vmatprep.subr.mxu0 0.0
    %80 = vmatpush1.msra.mxu0 %v49
    %81 = vmatprep.subr.mxu0 0.0
    %82 = vmatpush1.msra.mxu0 %v50
    %83 = vmatprep.subr.mxu0 0.0
    %84 = vmatpush1.msra.mxu0 %v51
    %85 = vmatprep.subr.mxu0 0.0
    %86 = vmatpush1.msra.mxu0 %v52
    %87 = vmatprep.subr.mxu0 0.0
    %88 = vmatpush1.msra.mxu0 %v53
    %89 = vmatprep.subr.mxu0 0.0
    %90 = vmatpush1.msra.mxu0 %v54
    %91 = vmatprep.subr.mxu0 0.0
    %92 = vmatpush1.msra.mxu0 %v55
    %93 = vmatprep.subr.mxu0 0.0
    %94 = vmatpush1.msra.mxu0 %v56
    %95 = vmatprep.subr.mxu0 0.0
    %96 = vmatpush1.msra.mxu0 %v57
    %97 = vmatprep.subr.mxu0 0.0
    %98 = vmatpush1.msra.mxu0 0.0
    %99 = vmatprep.subr.mxu0 0.0
    %100 = vmatpush1.msra.mxu0 0.0
    %101 = vmatprep.subr.mxu0 0.0
    %102 = vmatpush1.msra.mxu0 0.0
    %103 = vmatprep.subr.mxu0 0.0
    %104 = vmatpush1.msra.mxu0 0.0
    %105 = vmatprep.subr.mxu0 0.0
    %106 = vmatpush1.msra.mxu0 0.0
    %107 = vmatprep.subr.mxu0 0.0
    %108 = vmatpush1.msra.mxu0 0.0
    %109 = vmatprep.subr.mxu0 0.0
    %110 = vmatpush1.msra.mxu0 0.0
    %111 = vmatprep.subr.mxu0 0.0
    %112 = vmatpush1.msra.mxu0 0.0
    %113 = vmatprep.subr.mxu0 0.0
    %114 = vmatpush1.msra.mxu0 0.0
    %115 = vmatprep.subr.mxu0 0.0
    %116 = vmatpush1.msra.mxu0 0.0
    %117 = vmatprep.subr.mxu0 0.0
    %118 = vmatpush1.msra.mxu0 0.0
    %119 = vmatprep.subr.mxu0 0.0
    %120 = vmatpush1.msra.mxu0 0.0
    %121 = vmatprep.subr.mxu0 0.0
    %122 = vmatpush1.msra.mxu0 0.0
    %123 = vmatprep.subr.mxu0 0.0
    %124 = vmatpush1.msra.mxu0 0.0
    %125 = vmatprep.subr.mxu0 0.0
    %126 = vmatpush1.msra.mxu0 0.0
    %127 = vmatprep.subr.mxu0 0.0
    %128 = vmatpush1.msra.mxu0 0.0
    %129 = vmatprep.mubr.f32.mxu0 0.0
    %130 = vmatmul.mubr.f32.gmra.mrb[0].mxu0 %v41
    %v131 = vpop.f32.mrb[0].mxu0
    %v132 = vadd.f32 %v63, %v131
    %v133 = vpop.f32.mrb[0].mxu0
    %134 = vdwg.mxu0
    %135 = vst [vmem:[#allocation7] sm:$0xff] %v132
    // Predicated region
    $region22: #{tpu_custom_call.1} parent=1 // pred_check
      _
    $region23: #{tpu_custom_call.1} parent=1 // pred_check_branch
      %137 = sbr.rel (0) target = $region25
    $region24: #{tpu_custom_call.1} parent=1 // pred_region
      %s139 = ssub.s32 128, 128
      %140 = vsyncadd [#allocation4], %s139
      %s142 = sshll.u32 [#allocation7], 4
      %s143 = int_to_ptr.vmem [resolvable:$true] %s142
      %145 = dma.vmem_to_hbm [thread:$0]  %s143, 128, %s3, [#allocation4]
    $region25: #{tpu_custom_call.1} parent=1 // pred_fallthru
      _
    // Predicated region
    $region26: #{tpu_custom_call.1} parent=1 // pred_check
      _
    $region27: #{tpu_custom_call.1} parent=1 // pred_check_branch
      %147 = sbr.rel (0) target = $region29
    $region28: #{tpu_custom_call.1} parent=1 // pred_region
      %148 = dma.done [#allocation4], 128
    $region29: #{tpu_custom_call.1} parent=1 // pred_fallthru
      _
    %149 = vsyncpa [#allocation3], 1
    %150 = vsyncpa [#allocation6], 1
    %151 = vsyncpa [#allocation4], 1

</llo_original>
